<compile_context>
chip_gen: v7x
topology: tpu7x:2x2x1
jax: 0.10.0
libtpu: 0.0.40
codegen_flags: <defaults>
</compile_context>

<pallas_src>
import jax
import jax.numpy as jnp
import numpy as np
from jax.experimental import pallas as pl
from jax.experimental.pallas import tpu as pltpu

NUM_CLASSES = 26
C_IN = 4
H_IN = W_IN = 18              # 18x18 input -> 2x2 pool -> 9x9 maps -> avg_pool2d(9) -> 1x1
HW = H_IN * W_IN              # 324
K_IN = C_IN * HW              # 1296: flattened NCHW feature length per batch row
C_BRANCH = 32                 # scaled-down stand-in for each sub-net's feature channels
C_TOTAL = 4 * C_BRANCH        # 128: concat(feature0..3) channel count (lane-dense)
N_PAD = 128                   # fc output lanes padded 26 -> 128 (unmasked vst)


# ---------------------------------------------------------------------------
# Single fused kernel: (pool + branch convs + spatial mean) as one dot, + fc.
# ---------------------------------------------------------------------------
def _fused_forward_kernel(x_ref, wexp_ref, wfc_ref, bfc_ref, o_ref):
    """Whole HydraPlusNet forward (stubbed trunks) kept resident in VMEM.

    x:    (B, C_IN*HW)      f32   NCHW flattened (free reshape), lane-dense
    wexp: (C_IN*HW, C_TOTAL) bf16 branch 1x1-conv weights, repeated over HW
                                  and pre-divided by HW, so this single dot
                                  equals conv(spatial_mean(x)) for all 4 branches
    wfc:  (C_TOTAL, N_PAD)  bf16  nn.Linear weight (transposed), zero-padded 26->128
    bfc:  (1, N_PAD)        f32   fc bias with the branch conv bias folded in
    o:    (B, N_PAD)        f32
    """
    # Branch stubs + concat + avg_pool2d(9) spatial mean in ONE MXU pass.
    # Valid because the stub trunks are linear:
    #   mean_9x9(conv(pool2x2(x))) == conv(mean_18x18(x)) == x_flat @ wexp.
    feat = jnp.dot(x_ref[...].astype(jnp.bfloat16), wexp_ref[...],
                   preferred_element_type=jnp.float32)
    # feat == concat(spatial means of feature0..3) == fc_input.view(B, -1)
    # (branch bias folded into bfc offline).

    # TODO(synk): F.dropout treated as identity (eval mode); training-mode
    # dropout would mask `feat` via pltpu.prng_seed / pltpu.prng_random_bits.

    # Head fc: one (B,128)x(128,128) bf16 dot, f32 accumulation.
    logits = jnp.dot(feat.astype(jnp.bfloat16), wfc_ref[...],
                     preferred_element_type=jnp.float32) + bfc_ref[...]
    o_ref[...] = logits.astype(o_ref.dtype)

    # TODO(synk): the linear-pool fusion above must NOT carry over once real
    # (nonlinear) MainNet/AFNet trunks replace the stubs.
    # TODO(synk): when real channel counts arrive (fc input = 512*73 ~ 37k),
    # tile the fc K axis with a grid ("arbitrary") + f32 VMEM accumulator,
    # set vmem_limit_bytes explicitly (v7x has 64 MiB VMEM), and — if batch
    # grows to hundreds of rows — add a "parallel" batch grid axis so v7x
    # can shard across its 2 TensorCores.


# ---------------------------------------------------------------------------
# Parameters (synthetic; MainNet/AFNet trunks are not defined in the reference
# file, so each sub-net is stubbed as 2x2 avg-pool + 1x1 conv).
# ---------------------------------------------------------------------------
def init_params(key):
    ks = jax.random.split(key, 10)

    def lin(kw, kb, cin, cout, scale):
        w = scale * jax.random.normal(kw, (cin, cout), jnp.float32)
        b = scale * jax.random.normal(kb, (1, cout), jnp.float32)
        return w, b

    return {
        "main": lin(ks[0], ks[1], C_IN, C_BRANCH, 0.1),   # MainNet feature0 stub
        "af1":  lin(ks[2], ks[3], C_IN, C_BRANCH, 0.1),   # AF1 feature stub
        "af2":  lin(ks[4], ks[5], C_IN, C_BRANCH, 0.1),   # AF2 feature stub
        "af3":  lin(ks[6], ks[7], C_IN, C_BRANCH, 0.1),   # AF3 feature stub
        # fc stored as (C_TOTAL, NUM_CLASSES) == nn.Linear weight, transposed.
        "fc":   lin(ks[8], ks[9], C_TOTAL, NUM_CLASSES, 0.05),
    }


def fuse_params(params):
    """Offline (one-time) weight fusion:
      * stack the four branch 1x1-conv weights lane-dense (128 out lanes)
      * fold the spatial mean into the weights: repeat each channel row HW
        times (NCHW flatten order is channel-major) and pre-divide by HW
      * fold the branch conv bias into the fc bias (everything in between is
        linear), dropping one kernel input / DMA
      * pad fc to 128 output lanes; cast MXU operands to bf16.
    """
    branches = ("main", "af1", "af2", "af3")
    wconv = jnp.concatenate([params[k][0] for k in branches], axis=1)   # (C_IN, 128)
    bconv = jnp.concatenate([params[k][1] for k in branches], axis=1)   # (1, 128)

    # x_flat[b, c*HW + hw] @ wexp == sum_c mean_hw(x[b,c]) * wconv[c, :]
    wexp = jnp.repeat(wconv, HW, axis=0) / float(HW)                    # (1296, 128)

    wfc, bfc = params["fc"]
    wfc = jnp.pad(wfc, ((0, 0), (0, N_PAD - NUM_CLASSES)))              # (128, 128)
    bfc = jnp.pad(bfc, ((0, 0), (0, N_PAD - NUM_CLASSES)))              # (1, 128)
    bfc_eff = bconv @ wfc + bfc                                         # fold conv bias

    return (wexp.astype(jnp.bfloat16), wfc.astype(jnp.bfloat16), bfc_eff)


# ---------------------------------------------------------------------------
# Forward wrapper: one pallas_call, the only wrapper ops are a free reshape
# and the final 26-lane slice.
# ---------------------------------------------------------------------------
@jax.jit
def hydraplus_forward(x_nchw, fused):
    wexp, wfc, bfc = fused
    B = x_nchw.shape[0]
    # NCHW is already contiguous as (B, C*H*W): no transpose, no pad.
    x = x_nchw.reshape(B, K_IN)

    out = pl.pallas_call(
        _fused_forward_kernel,
        out_shape=jax.ShapeDtypeStruct((B, N_PAD), jnp.float32),
        in_specs=[pl.BlockSpec(memory_space=pltpu.MemorySpace.VMEM)] * 4,
        out_specs=pl.BlockSpec(memory_space=pltpu.MemorySpace.VMEM),
    )(x, wexp, wfc, bfc)

    # Slice the lane-padded logits back to (B, NUM_CLASSES).
    return out[:, :NUM_CLASSES]


# Pure-JAX reference of the same (stubbed) forward, f32 throughout.
def _reference_forward(x_nchw, params):
    B = x_nchw.shape[0]
    m = jnp.mean(x_nchw.reshape(B, C_IN, HW), axis=-1)                  # (B, C_IN)
    feats = [m @ params[k][0] + params[k][1]
             for k in ("main", "af1", "af2", "af3")]
    feat = jnp.concatenate(feats, axis=1)                               # (B, 128)
    wfc, bfc = params["fc"]
    return feat @ wfc + bfc                                             # (B, 26)


if __name__ == "__main__":
    key = jax.random.PRNGKey(0)
    kx, kp = jax.random.split(key)
    # Input follows PyTorch NCHW convention.
    x = jax.random.normal(kx, (2, C_IN, H_IN, W_IN), jnp.float32)
    params = init_params(kp)
    fused = fuse_params(params)

    out = hydraplus_forward(x, fused)
    jax.block_until_ready(out)

    assert out.shape == (2, NUM_CLASSES), out.shape
    assert bool(jnp.all(jnp.isfinite(out)))

    # Loose-tolerance check vs. an f32 pure-JAX reference (kernel uses bf16 MXU).
    ref = _reference_forward(x, params)
    np.testing.assert_allclose(np.asarray(out), np.asarray(ref),
                               rtol=5e-2, atol=5e-2)

    print("KERNEL_OK")
</pallas_src>

<mosaic_0001>
module attributes {stable_mosaic.version = 11 : i64} {
  func.func @_fused_forward_kernel(%arg0: memref<2x1296xf32, #tpu.memory_space<vmem>>, %arg1: memref<1296x128xbf16, #tpu.memory_space<vmem>>, %arg2: memref<128x128xbf16, #tpu.memory_space<vmem>>, %arg3: memref<1x128xf32, #tpu.memory_space<vmem>>, %arg4: memref<2x128xf32, #tpu.memory_space<vmem>>) attributes {dimension_semantics = [], scalar_prefetch = 0 : i64, scratch_operands = 0 : i64, tpu.core_type = #tpu.core_type<tc>} {
    %c0 = arith.constant 0 : index
    %c0_0 = arith.constant 0 : index
    %0 = vector.load %arg0[%c0, %c0_0] : memref<2x1296xf32, #tpu.memory_space<vmem>>, vector<2x1296xf32>
    %1 = arith.truncf %0 : vector<2x1296xf32> to vector<2x1296xbf16>
    %c0_1 = arith.constant 0 : index
    %c0_2 = arith.constant 0 : index
    %2 = vector.load %arg1[%c0_1, %c0_2] : memref<1296x128xbf16, #tpu.memory_space<vmem>>, vector<1296x128xbf16>
    %cst = arith.constant dense<0.000000e+00> : vector<2x128xf32>
    %3 = tpu.matmul %1, %2, %cst {dimension_numbers = #tpu.dot_dimension_numbers<[1], [0], [0], [1], [0, 0, 1, 1], [], []>} : vector<2x1296xbf16>, vector<1296x128xbf16>, vector<2x128xf32> -> vector<2x128xf32>
    %4 = arith.truncf %3 : vector<2x128xf32> to vector<2x128xbf16>
    %c0_3 = arith.constant 0 : index
    %c0_4 = arith.constant 0 : index
    %5 = vector.load %arg2[%c0_3, %c0_4] : memref<128x128xbf16, #tpu.memory_space<vmem>>, vector<128x128xbf16>
    %cst_5 = arith.constant dense<0.000000e+00> : vector<2x128xf32>
    %6 = tpu.matmul %4, %5, %cst_5 {dimension_numbers = #tpu.dot_dimension_numbers<[1], [0], [0], [1], [0, 0, 1, 1], [], []>} : vector<2x128xbf16>, vector<128x128xbf16>, vector<2x128xf32> -> vector<2x128xf32>
    %c0_6 = arith.constant 0 : index
    %c0_7 = arith.constant 0 : index
    %7 = vector.load %arg3[%c0_6, %c0_7] : memref<1x128xf32, #tpu.memory_space<vmem>>, vector<1x128xf32>
    %8 = vector.broadcast %7 : vector<1x128xf32> to vector<2x128xf32>
    %9 = arith.addf %6, %8 : vector<2x128xf32>
    %c0_8 = arith.constant 0 : index
    %c0_9 = arith.constant 0 : index
    %10 = vector.load %arg4[%c0_8, %c0_9] : memref<2x128xf32, #tpu.memory_space<vmem>>, vector<2x128xf32>
    tpu.vector_store %arg4[%c0_8, %c0_9], %9 {strides = array<i32>} : memref<2x128xf32, #tpu.memory_space<vmem>>, vector<2x128xf32>,
    return
  }
}

</mosaic_0001>

<llo_original>
// kernel: hydraplus_forward.1
$region0: #{hydraplus_forward.1}
  #allocation0 [shape = 'u32[]', space=smem, size = 0x4, offset = 0x4, fixed_abs, tag = 'smem constant byte address 0x4 - core index']
  #allocation1 [shape = 'u32[144,128]{1,0:T(1,128)}', space=vmem, size = 0x12000, scoped, tag = 'internal scratch']
  %s0 = inlined_call_operand.vmem [shape: f32[2,1296], index: 0, kind: input, shape index: {}]
  %s1 = inlined_call_operand.hbm [shape: bf16[1296,128], index: 1, kind: input, shape index: {}]
  %s2 = inlined_call_operand.vmem [shape: bf16[128,128], index: 2, kind: input, shape index: {}]
  %s3 = inlined_call_operand.vmem [shape: f32[1,128], index: 3, kind: input, shape index: {}]
  %s4 = inlined_call_operand.hbm [shape: f32[2,128], index: 4, kind: output, shape index: {}]
  %s5 = sld [smem:[#allocation0]]
  $region30: #{hydraplus_forward.1} parent=0
    _
  %s7 = ssub.s32 1, %s5
  %s8 = scalar_select 0, %s7, %s5
  $region1: #{hydraplus_forward.1} parent=0
    #allocation2 [shape = 'u8[331776]{0}', space=vmem, size = 0x51000, scoped, tag = 'input window, operand 1, single buffered']
    #allocation3 [shape = 's32[1]{0}', space=sflag, size = 0x4, scoped, tag = 'scoped memory for hydraplus_forward.1']
    #allocation4 [shape = 's32[1]{0}', space=sflag, size = 0x4, scoped, tag = 'scoped memory for hydraplus_forward.1']
    #allocation5 [shape = 'u8[1024]{0}', space=vmem, size = 0x400, scoped, tag = 'output window, operand 0, single buffered']
    %9 = vsyncpa [#allocation3], 0
    %10 = vsyncpa [#allocation4], 0
    // Predicated region
    $region2: #{hydraplus_forward.1} parent=1 // pred_check
      _
    $region3: #{hydraplus_forward.1} parent=1 // pred_check_branch
      %12 = sbr.rel (0) target = $region5
    $region4: #{hydraplus_forward.1} parent=1 // pred_region
      _
    $region5: #{hydraplus_forward.1} parent=1 // pred_fallthru
      _
    // Predicated region
    $region6: #{hydraplus_forward.1} parent=1 // pred_check
      _
    $region7: #{hydraplus_forward.1} parent=1 // pred_check_branch
      %14 = sbr.rel (0) target = $region9
    $region8: #{hydraplus_forward.1} parent=1 // pred_region
      %s16 = ssub.s32 10368, 10368
      %17 = vsyncadd [#allocation3], %s16
      %s18 = sshll.u32 [#allocation2], 4
      %s19 = int_to_ptr.vmem [resolvable:$true] %s18
      %24 = dma.hbm_to_vmem [thread:$0]  %s1, 10368, %s19, [#allocation3], 64, 64, 4
    $region9: #{hydraplus_forward.1} parent=1 // pred_fallthru
      _
    // Predicated region
    $region10: #{hydraplus_forward.1} parent=1 // pred_check
      _
    $region11: #{hydraplus_forward.1} parent=1 // pred_check_branch
      %26 = sbr.rel (0) target = $region13
    $region12: #{hydraplus_forward.1} parent=1 // pred_region
      _
    $region13: #{hydraplus_forward.1} parent=1 // pred_fallthru
      _
    // Predicated region
    $region14: #{hydraplus_forward.1} parent=1 // pred_check
      _
    $region15: #{hydraplus_forward.1} parent=1 // pred_check_branch
      %28 = sbr.rel (0) target = $region17
    $region16: #{hydraplus_forward.1} parent=1 // pred_region
      _
    $region17: #{hydraplus_forward.1} parent=1 // pred_fallthru
      _
    // Predicated region
    $region18: #{hydraplus_forward.1} parent=1 // pred_check
      _
    $region19: #{hydraplus_forward.1} parent=1 // pred_check_branch
      %30 = sbr.rel (0) target = $region21
    $region20: #{hydraplus_forward.1} parent=1 // pred_region
      %31 = dma.done [#allocation3], 10368
    $region21: #{hydraplus_forward.1} parent=1 // pred_fallthru
      _
    %v33 = vld [vmem:[%s0] sm:$0xff]
    %v34 = vld [vmem:[%s0 + $0x8] sm:$0xff]
    %v35 = vld [vmem:[%s0 + $0x10] sm:$0x3f]
    %v39 = vcombine.high %v33, %v33
    %v41 = vunpack.c.l.s4 1983009808
    %v42 = vunpack.c.0.s8 %v41
    %v43 = vlaneseq
    %v44 = vshrl.u32 %v43, 7
    %v45 = vsub.s32 %v42, %v44
    %v46 = vrot.slane %v33, %v45
    %v48 = vunpack.c.l.s4 1983009808
    %v49 = vunpack.c.0.s8 %v48
    %v50 = vlaneseq
    %v51 = vshrl.u32 %v50, 7
    %v52 = vsub.s32 %v49, %v51
    %v53 = vrot.slane %v39, %v52
    %v54 = vcombine.high %v46, %v46
    %v55 = vcombine.high %v53, %v53
    %v56 = vcombine.high %v34, %v34
    %v58 = vunpack.c.l.s4 1983009808
    %v59 = vunpack.c.0.s8 %v58
    %v60 = vlaneseq
    %v61 = vshrl.u32 %v60, 7
    %v62 = vsub.s32 %v59, %v61
    %v63 = vrot.slane %v34, %v62
    %v65 = vunpack.c.l.s4 1983009808
    %v66 = vunpack.c.0.s8 %v65
    %v67 = vlaneseq
    %v68 = vshrl.u32 %v67, 7
    %v69 = vsub.s32 %v66, %v68
    %v70 = vrot.slane %v56, %v69
    %v71 = vcombine.high %v63, %v63
    %v72 = vcombine.high %v70, %v70
    %v73 = vcombine.high %v35, %v35
    %v75 = vunpack.c.l.s4 1983009808
    %v76 = vunpack.c.0.s8 %v75
    %v77 = vlaneseq
    %v78 = vshrl.u32 %v77, 7
    %v79 = vsub.s32 %v76, %v78
    %v80 = vrot.slane %v35, %v79
    %v82 = vunpack.c.l.s4 1983009808
    %v83 = vunpack.c.0.s8 %v82
    %v84 = vlaneseq
    %v85 = vshrl.u32 %v84, 7
    %v86 = vsub.s32 %v83, %v85
    %v87 = vrot.slane %v73, %v86
    %v88 = vcombine.high %v80, %v80
    %v100 = vpack.c.bf16 %v46, %v46
    %v101 = vpack.c.bf16 %v54, %v54
    %v102 = vpack.c.bf16 %v53, %v53
    %v103 = vpack.c.bf16 %v55, %v55
    %v104 = vpack.c.bf16 %v63, %v63
    %v105 = vpack.c.bf16 %v71, %v71
    %v106 = vpack.c.bf16 %v70, %v70
    %v107 = vpack.c.bf16 %v72, %v72
    %v108 = vpack.c.bf16 %v80, %v80
    %v109 = vpack.c.bf16 %v88, %v88
    %v110 = vpack.c.bf16 %v87, %v87
    %v111 = vld [vmem:[#allocation2] sm:$0xf]
    %v112 = vld [vmem:[#allocation2 + $0x4] sm:$0xf]
    %v113 = vld [vmem:[#allocation2 + $0x8] sm:$0xf]
    %v114 = vld [vmem:[#allocation2 + $0xc] sm:$0xf]
    %v115 = vld [vmem:[#allocation2 + $0x10] sm:$0xf]
    %v116 = vld [vmem:[#allocation2 + $0x14] sm:$0xf]
    %v117 = vld [vmem:[#allocation2 + $0x18] sm:$0xf]
    %v118 = vld [vmem:[#allocation2 + $0x1c] sm:$0xf]
    %v119 = vld [vmem:[#allocation2 + $0x20] sm:$0xf]
    %v120 = vld [vmem:[#allocation2 + $0x24] sm:$0xf]
    %v121 = vld [vmem:[#allocation2 + $0x28] sm:$0xf]
    %v122 = vld [vmem:[#allocation2 + $0x2c] sm:$0xf]
    %v123 = vld [vmem:[#allocation2 + $0x30] sm:$0xf]
    %v124 = vld [vmem:[#allocation2 + $0x34] sm:$0xf]
    %v125 = vld [vmem:[#allocation2 + $0x38] sm:$0xf]
    %v126 = vld [vmem:[#allocation2 + $0x3c] sm:$0xf]
    %v127 = vld [vmem:[#allocation2 + $0x40] sm:$0xf]
    %v128 = vld [vmem:[#allocation2 + $0x44] sm:$0xf]
    %v129 = vld [vmem:[#allocation2 + $0x48] sm:$0xf]
    %v130 = vld [vmem:[#allocation2 + $0x4c] sm:$0xf]
    %v131 = vld [vmem:[#allocation2 + $0x50] sm:$0xf]
    %v132 = vld [vmem:[#allocation2 + $0x54] sm:$0xf]
    %v133 = vld [vmem:[#allocation2 + $0x58] sm:$0xf]
    %v134 = vld [vmem:[#allocation2 + $0x5c] sm:$0xf]
    %v135 = vld [vmem:[#allocation2 + $0x60] sm:$0xf]
    %v136 = vld [vmem:[#allocation2 + $0x64] sm:$0xf]
    %v137 = vld [vmem:[#allocation2 + $0x68] sm:$0xf]
    %v138 = vld [vmem:[#allocation2 + $0x6c] sm:$0xf]
    %v139 = vld [vmem:[#allocation2 + $0x70] sm:$0xf]
    %v140 = vld [vmem:[#allocation2 + $0x74] sm:$0xf]
    %v141 = vld [vmem:[#allocation2 + $0x78] sm:$0xf]
    %v142 = vld [vmem:[#allocation2 + $0x7c] sm:$0xf]
    %v143 = vld [vmem:[#allocation2 + $0x80] sm:$0xf]
    %v144 = vld [vmem:[#allocation2 + $0x84] sm:$0xf]
    %v145 = vld [vmem:[#allocation2 + $0x88] sm:$0xf]
    %v146 = vld [vmem:[#allocation2 + $0x8c] sm:$0xf]
    %v147 = vld [vmem:[#allocation2 + $0x90] sm:$0xf]
    %v148 = vld [vmem:[#allocation2 + $0x94] sm:$0xf]
    %v149 = vld [vmem:[#allocation2 + $0x98] sm:$0xf]
    %v150 = vld [vmem:[#allocation2 + $0x9c] sm:$0xf]
    %v151 = vld [vmem:[#allocation2 + $0xa0] sm:$0xf]
    %v152 = vld [vmem:[#allocation2 + $0xa4] sm:$0xf]
    %v153 = vld [vmem:[#allocation2 + $0xa8] sm:$0xf]
    %v154 = vld [vmem:[#allocation2 + $0xac] sm:$0xf]
    %v155 = vld [vmem:[#allocation2 + $0xb0] sm:$0xf]
    %v156 = vld [vmem:[#allocation2 + $0xb4] sm:$0xf]
    %v157 = vld [vmem:[#allocation2 + $0xb8] sm:$0xf]
    %v158 = vld [vmem:[#allocation2 + $0xbc] sm:$0xf]
    %v159 = vld [vmem:[#allocation2 + $0xc0] sm:$0xf]
    %v160 = vld [vmem:[#allocation2 + $0xc4] sm:$0xf]
    %v161 = vld [vmem:[#allocation2 + $0xc8] sm:$0xf]
    %v162 = vld [vmem:[#allocation2 + $0xcc] sm:$0xf]
    %v163 = vld [vmem:[#allocation2 + $0xd0] sm:$0xf]
    %v164 = vld [vmem:[#allocation2 + $0xd4] sm:$0xf]
    %v165 = vld [vmem:[#allocation2 + $0xd8] sm:$0xf]
    %v166 = vld [vmem:[#allocation2 + $0xdc] sm:$0xf]
    %v167 = vld [vmem:[#allocation2 + $0xe0] sm:$0xf]
    %v168 = vld [vmem:[#allocation2 + $0xe4] sm:$0xf]
    %v169 = vld [vmem:[#allocation2 + $0xe8] sm:$0xf]
    %v170 = vld [vmem:[#allocation2 + $0xec] sm:$0xf]
    %v171 = vld [vmem:[#allocation2 + $0xf0] sm:$0xf]
    %v172 = vld [vmem:[#allocation2 + $0xf4] sm:$0xf]
    %v173 = vld [vmem:[#allocation2 + $0xf8] sm:$0xf]
    %v174 = vld [vmem:[#allocation2 + $0xfc] sm:$0xf]
    %v175 = vld [vmem:[#allocation2 + $0x100] sm:$0xf]
    %v176 = vld [vmem:[#allocation2 + $0x104] sm:$0xf]
    %v177 = vld [vmem:[#allocation2 + $0x108] sm:$0xf]
    %v178 = vld [vmem:[#allocation2 + $0x10c] sm:$0xf]
    %v179 = vld [vmem:[#allocation2 + $0x110] sm:$0xf]
    %v180 = vld [vmem:[#allocation2 + $0x114] sm:$0xf]
    %v181 = vld [vmem:[#allocation2 + $0x118] sm:$0xf]
    %v182 = vld [vmem:[#allocation2 + $0x11c] sm:$0xf]
    %v183 = vld [vmem:[#allocation2 + $0x120] sm:$0xf]
    %v184 = vld [vmem:[#allocation2 + $0x124] sm:$0xf]
    %v185 = vld [vmem:[#allocation2 + $0x128] sm:$0xf]
    %v186 = vld [vmem:[#allocation2 + $0x12c] sm:$0xf]
    %v187 = vld [vmem:[#allocation2 + $0x130] sm:$0xf]
    %v188 = vld [vmem:[#allocation2 + $0x134] sm:$0xf]
    %v189 = vld [vmem:[#allocation2 + $0x138] sm:$0xf]
    %v190 = vld [vmem:[#allocation2 + $0x13c] sm:$0xf]
    %v191 = vld [vmem:[#allocation2 + $0x140] sm:$0xf]
    %v192 = vld [vmem:[#allocation2 + $0x144] sm:$0xf]
    %v193 = vld [vmem:[#allocation2 + $0x148] sm:$0xf]
    %v194 = vld [vmem:[#allocation2 + $0x14c] sm:$0xf]
    %v195 = vld [vmem:[#allocation2 + $0x150] sm:$0xf]
    %v196 = vld [vmem:[#allocation2 + $0x154] sm:$0xf]
    %v197 = vld [vmem:[#allocation2 + $0x158] sm:$0xf]
    %v198 = vld [vmem:[#allocation2 + $0x15c] sm:$0xf]
    %v199 = vld [vmem:[#allocation2 + $0x160] sm:$0xf]
    %v200 = vld [vmem:[#allocation2 + $0x164] sm:$0xf]
    %v201 = vld [vmem:[#allocation2 + $0x168] sm:$0xf]
    %v202 = vld [vmem:[#allocation2 + $0x16c] sm:$0xf]
    %v203 = vld [vmem:[#allocation2 + $0x170] sm:$0xf]
    %v204 = vld [vmem:[#allocation2 + $0x174] sm:$0xf]
    %v205 = vld [vmem:[#allocation2 + $0x178] sm:$0xf]
    %v206 = vld [vmem:[#allocation2 + $0x17c] sm:$0xf]
    %v207 = vld [vmem:[#allocation2 + $0x180] sm:$0xf]
    %v208 = vld [vmem:[#allocation2 + $0x184] sm:$0xf]
    %v209 = vld [vmem:[#allocation2 + $0x188] sm:$0xf]
    %v210 = vld [vmem:[#allocation2 + $0x18c] sm:$0xf]
    %v211 = vld [vmem:[#allocation2 + $0x190] sm:$0xf]
    %v212 = vld [vmem:[#allocation2 + $0x194] sm:$0xf]
    %v213 = vld [vmem:[#allocation2 + $0x198] sm:$0xf]
    %v214 = vld [vmem:[#allocation2 + $0x19c] sm:$0xf]
    %v215 = vld [vmem:[#allocation2 + $0x1a0] sm:$0xf]
    %v216 = vld [vmem:[#allocation2 + $0x1a4] sm:$0xf]
    %v217 = vld [vmem:[#allocation2 + $0x1a8] sm:$0xf]
    %v218 = vld [vmem:[#allocation2 + $0x1ac] sm:$0xf]
    %v219 = vld [vmem:[#allocation2 + $0x1b0] sm:$0xf]
    %v220 = vld [vmem:[#allocation2 + $0x1b4] sm:$0xf]
    %v221 = vld [vmem:[#allocation2 + $0x1b8] sm:$0xf]
    %v222 = vld [vmem:[#allocation2 + $0x1bc] sm:$0xf]
    %v223 = vld [vmem:[#allocation2 + $0x1c0] sm:$0xf]
    %v224 = vld [vmem:[#allocation2 + $0x1c4] sm:$0xf]
    %v225 = vld [vmem:[#allocation2 + $0x1c8] sm:$0xf]
    %v226 = vld [vmem:[#allocation2 + $0x1cc] sm:$0xf]
    %v227 = vld [vmem:[#allocation2 + $0x1d0] sm:$0xf]
    %v228 = vld [vmem:[#allocation2 + $0x1d4] sm:$0xf]
    %v229 = vld [vmem:[#allocation2 + $0x1d8] sm:$0xf]
    %v230 = vld [vmem:[#allocation2 + $0x1dc] sm:$0xf]
    %v231 = vld [vmem:[#allocation2 + $0x1e0] sm:$0xf]
    %v232 = vld [vmem:[#allocation2 + $0x1e4] sm:$0xf]
    %v233 = vld [vmem:[#allocation2 + $0x1e8] sm:$0xf]
    %v234 = vld [vmem:[#allocation2 + $0x1ec] sm:$0xf]
    %v235 = vld [vmem:[#allocation2 + $0x1f0] sm:$0xf]
    %v236 = vld [vmem:[#allocation2 + $0x1f4] sm:$0xf]
    %v237 = vld [vmem:[#allocation2 + $0x1f8] sm:$0xf]
    %v238 = vld [vmem:[#allocation2 + $0x1fc] sm:$0xf]
    %v239 = vld [vmem:[#allocation2 + $0x200] sm:$0xf]
    %v240 = vld [vmem:[#allocation2 + $0x204] sm:$0xf]
    %v241 = vld [vmem:[#allocation2 + $0x208] sm:$0xf]
    %v242 = vld [vmem:[#allocation2 + $0x20c] sm:$0xf]
    %v243 = vld [vmem:[#allocation2 + $0x210] sm:$0xf]
    %v244 = vld [vmem:[#allocation2 + $0x214] sm:$0xf]
    %v245 = vld [vmem:[#allocation2 + $0x218] sm:$0xf]
    %v246 = vld [vmem:[#allocation2 + $0x21c] sm:$0xf]
    %v247 = vld [vmem:[#allocation2 + $0x220] sm:$0xf]
    %v248 = vld [vmem:[#allocation2 + $0x224] sm:$0xf]
    %v249 = vld [vmem:[#allocation2 + $0x228] sm:$0xf]
    %v250 = vld [vmem:[#allocation2 + $0x22c] sm:$0xf]
    %v251 = vld [vmem:[#allocation2 + $0x230] sm:$0xf]
    %v252 = vld [vmem:[#allocation2 + $0x234] sm:$0xf]
    %v253 = vld [vmem:[#allocation2 + $0x238] sm:$0xf]
    %v254 = vld [vmem:[#allocation2 + $0x23c] sm:$0xf]
    %v255 = vld [vmem:[#allocation2 + $0x240] sm:$0xf]
    %v256 = vld [vmem:[#allocation2 + $0x244] sm:$0xf]
    %v257 = vld [vmem:[#allocation2 + $0x248] sm:$0xf]
    %v258 = vld [vmem:[#allocation2 + $0x24c] sm:$0xf]
    %v259 = vld [vmem:[#allocation2 + $0x250] sm:$0xf]
    %v260 = vld [vmem:[#allocation2 + $0x254] sm:$0xf]
    %v261 = vld [vmem:[#allocation2 + $0x258] sm:$0xf]
    %v262 = vld [vmem:[#allocation2 + $0x25c] sm:$0xf]
    %v263 = vld [vmem:[#allocation2 + $0x260] sm:$0xf]
    %v264 = vld [vmem:[#allocation2 + $0x264] sm:$0xf]
    %v265 = vld [vmem:[#allocation2 + $0x268] sm:$0xf]
    %v266 = vld [vmem:[#allocation2 + $0x26c] sm:$0xf]
    %v267 = vld [vmem:[#allocation2 + $0x270] sm:$0xf]
    %v268 = vld [vmem:[#allocation2 + $0x274] sm:$0xf]
    %v269 = vld [vmem:[#allocation2 + $0x278] sm:$0xf]
    %v270 = vld [vmem:[#allocation2 + $0x27c] sm:$0xf]
    %v271 = vld [vmem:[#allocation2 + $0x280] sm:$0xf]
    %v272 = vld [vmem:[#allocation2 + $0x284] sm:$0xf]
    %v435 = vunpack.c.l.b16 %v111
    %v436 = vunpack.c.l.b16 %v112
    %v437 = vunpack.c.l.b16 %v113
    %v438 = vunpack.c.l.b16 %v114
    %v439 = vunpack.c.l.b16 %v115
    %v440 = vunpack.c.l.b16 %v116
    %v441 = vunpack.c.l.b16 %v117
    %v442 = vunpack.c.l.b16 %v118
    %v443 = vunpack.c.l.b16 %v119
    %v444 = vunpack.c.l.b16 %v120
    %v445 = vunpack.c.l.b16 %v121
    %v446 = vunpack.c.l.b16 %v122
    %v447 = vunpack.c.l.b16 %v123
    %v448 = vunpack.c.l.b16 %v124
    %v449 = vunpack.c.l.b16 %v125
    %v450 = vunpack.c.l.b16 %v126
    %v451 = vunpack.c.l.b16 %v127
    %v452 = vunpack.c.l.b16 %v128
    %v453 = vunpack.c.l.b16 %v129
    %v454 = vunpack.c.l.b16 %v130
    %v455 = vunpack.c.l.b16 %v131
    %v456 = vunpack.c.l.b16 %v132
    %v457 = vunpack.c.l.b16 %v133
    %v458 = vunpack.c.l.b16 %v134
    %v459 = vunpack.c.l.b16 %v135
    %v460 = vunpack.c.l.b16 %v136
    %v461 = vunpack.c.l.b16 %v137
    %v462 = vunpack.c.l.b16 %v138
    %v463 = vunpack.c.l.b16 %v139
    %v464 = vunpack.c.l.b16 %v140
    %v465 = vunpack.c.l.b16 %v141
    %v466 = vunpack.c.l.b16 %v142
    %v467 = vunpack.c.l.b16 %v143
    %v468 = vunpack.c.l.b16 %v144
    %v469 = vunpack.c.l.b16 %v145
    %v470 = vunpack.c.l.b16 %v146
    %v471 = vunpack.c.l.b16 %v147
    %v472 = vunpack.c.l.b16 %v148
    %v473 = vunpack.c.l.b16 %v149
    %v474 = vunpack.c.l.b16 %v150
    %v475 = vunpack.c.l.b16 %v151
    %v476 = vunpack.c.l.b16 %v152
    %v477 = vunpack.c.l.b16 %v153
    %v478 = vunpack.c.l.b16 %v154
    %v479 = vunpack.c.l.b16 %v155
    %v480 = vunpack.c.l.b16 %v156
    %v481 = vunpack.c.l.b16 %v157
    %v482 = vunpack.c.l.b16 %v158
    %v483 = vunpack.c.l.b16 %v159
    %v484 = vunpack.c.l.b16 %v160
    %v485 = vunpack.c.l.b16 %v161
    %v486 = vunpack.c.l.b16 %v162
    %v487 = vunpack.c.l.b16 %v163
    %v488 = vunpack.c.l.b16 %v164
    %v489 = vunpack.c.l.b16 %v165
    %v490 = vunpack.c.l.b16 %v166
    %v491 = vunpack.c.l.b16 %v167
    %v492 = vunpack.c.l.b16 %v168
    %v493 = vunpack.c.l.b16 %v169
    %v494 = vunpack.c.l.b16 %v170
    %v495 = vunpack.c.l.b16 %v171
    %v496 = vunpack.c.l.b16 %v172
    %v497 = vunpack.c.l.b16 %v173
    %v498 = vunpack.c.l.b16 %v174
    %v499 = vunpack.c.l.b16 %v175
    %v500 = vunpack.c.l.b16 %v176
    %v501 = vunpack.c.l.b16 %v177
    %v502 = vunpack.c.l.b16 %v178
    %v503 = vunpack.c.l.b16 %v179
    %v504 = vunpack.c.l.b16 %v180
    %v505 = vunpack.c.l.b16 %v181
    %v506 = vunpack.c.l.b16 %v182
    %v507 = vunpack.c.l.b16 %v183
    %v508 = vunpack.c.l.b16 %v184
    %v509 = vunpack.c.l.b16 %v185
    %v510 = vunpack.c.l.b16 %v186
    %v511 = vunpack.c.l.b16 %v187
    %v512 = vunpack.c.l.b16 %v188
    %v513 = vunpack.c.l.b16 %v189
    %v514 = vunpack.c.l.b16 %v190
    %v515 = vunpack.c.l.b16 %v191
    %v516 = vunpack.c.l.b16 %v192
    %v517 = vunpack.c.l.b16 %v193
    %v518 = vunpack.c.l.b16 %v194
    %v519 = vunpack.c.l.b16 %v195
    %v520 = vunpack.c.l.b16 %v196
    %v521 = vunpack.c.l.b16 %v197
    %v522 = vunpack.c.l.b16 %v198
    %v523 = vunpack.c.l.b16 %v199
    %v524 = vunpack.c.l.b16 %v200
    %v525 = vunpack.c.l.b16 %v201
    %v526 = vunpack.c.l.b16 %v202
    %v527 = vunpack.c.l.b16 %v203
    %v528 = vunpack.c.l.b16 %v204
    %v529 = vunpack.c.l.b16 %v205
    %v530 = vunpack.c.l.b16 %v206
    %v531 = vunpack.c.l.b16 %v207
    %v532 = vunpack.c.l.b16 %v208
    %v533 = vunpack.c.l.b16 %v209
    %v534 = vunpack.c.l.b16 %v210
    %v535 = vunpack.c.l.b16 %v211
    %v536 = vunpack.c.l.b16 %v212
    %v537 = vunpack.c.l.b16 %v213
    %v538 = vunpack.c.l.b16 %v214
    %v539 = vunpack.c.l.b16 %v215
    %v540 = vunpack.c.l.b16 %v216
    %v541 = vunpack.c.l.b16 %v217
    %v542 = vunpack.c.l.b16 %v218
    %v543 = vunpack.c.l.b16 %v219
    %v544 = vunpack.c.l.b16 %v220
    %v545 = vunpack.c.l.b16 %v221
    %v546 = vunpack.c.l.b16 %v222
    %v547 = vunpack.c.l.b16 %v223
    %v548 = vunpack.c.l.b16 %v224
    %v549 = vunpack.c.l.b16 %v225
    %v550 = vunpack.c.l.b16 %v226
    %v551 = vunpack.c.l.b16 %v227
    %v552 = vunpack.c.l.b16 %v228
    %v553 = vunpack.c.l.b16 %v229
    %v554 = vunpack.c.l.b16 %v230
    %v555 = vunpack.c.l.b16 %v231
    %v556 = vunpack.c.l.b16 %v232
    %v557 = vunpack.c.l.b16 %v233
    %v558 = vunpack.c.l.b16 %v234
    %v559 = vunpack.c.l.b16 %v235
    %v560 = vunpack.c.l.b16 %v236
    %v561 = vunpack.c.l.b16 %v237
    %v562 = vunpack.c.l.b16 %v238
    %v563 = vunpack.c.l.b16 %v239
    %v564 = vunpack.c.l.b16 %v240
    %v565 = vunpack.c.l.b16 %v241
    %v566 = vunpack.c.l.b16 %v242
    %v567 = vunpack.c.l.b16 %v243
    %v568 = vunpack.c.l.b16 %v244
    %v569 = vunpack.c.l.b16 %v245
    %v570 = vunpack.c.l.b16 %v246
    %v571 = vunpack.c.l.b16 %v247
    %v572 = vunpack.c.l.b16 %v248
    %v573 = vunpack.c.l.b16 %v249
    %v574 = vunpack.c.l.b16 %v250
    %v575 = vunpack.c.l.b16 %v251
    %v576 = vunpack.c.l.b16 %v252
    %v577 = vunpack.c.l.b16 %v253
    %v578 = vunpack.c.l.b16 %v254
    %v579 = vunpack.c.l.b16 %v255
    %v580 = vunpack.c.l.b16 %v256
    %v581 = vunpack.c.l.b16 %v257
    %v582 = vunpack.c.l.b16 %v258
    %v583 = vunpack.c.l.b16 %v259
    %v584 = vunpack.c.l.b16 %v260
    %v585 = vunpack.c.l.b16 %v261
    %v586 = vunpack.c.l.b16 %v262
    %v587 = vunpack.c.l.b16 %v263
    %v588 = vunpack.c.l.b16 %v264
    %v589 = vunpack.c.l.b16 %v265
    %v590 = vunpack.c.l.b16 %v266
    %v591 = vunpack.c.l.b16 %v267
    %v592 = vunpack.c.l.b16 %v268
    %v593 = vunpack.c.l.b16 %v269
    %v594 = vunpack.c.l.b16 %v270
    %v595 = vunpack.c.l.b16 %v271
    %v596 = vunpack.c.l.b16 %v272
    %v597 = vpack.c.b16 %v436, %v435
    %v598 = vpack.c.b16 %v438, %v437
    %v599 = vpack.c.b16 %v440, %v439
    %v600 = vpack.c.b16 %v442, %v441
    %v601 = vpack.c.b16 %v444, %v443
    %v602 = vpack.c.b16 %v446, %v445
    %v603 = vpack.c.b16 %v448, %v447
    %v604 = vpack.c.b16 %v450, %v449
    %v605 = vpack.c.b16 %v452, %v451
    %v606 = vpack.c.b16 %v454, %v453
    %v607 = vpack.c.b16 %v456, %v455
    %v608 = vpack.c.b16 %v458, %v457
    %v609 = vpack.c.b16 %v460, %v459
    %v610 = vpack.c.b16 %v462, %v461
    %v611 = vpack.c.b16 %v464, %v463
    %v612 = vpack.c.b16 %v466, %v465
    %v613 = vpack.c.b16 %v468, %v467
    %v614 = vpack.c.b16 %v470, %v469
    %v615 = vpack.c.b16 %v472, %v471
    %v616 = vpack.c.b16 %v474, %v473
    %v617 = vpack.c.b16 %v476, %v475
    %v618 = vpack.c.b16 %v478, %v477
    %v619 = vpack.c.b16 %v480, %v479
    %v620 = vpack.c.b16 %v482, %v481
    %v621 = vpack.c.b16 %v484, %v483
    %v622 = vpack.c.b16 %v486, %v485
    %v623 = vpack.c.b16 %v488, %v487
    %v624 = vpack.c.b16 %v490, %v489
    %v625 = vpack.c.b16 %v492, %v491
    %v626 = vpack.c.b16 %v494, %v493
    %v627 = vpack.c.b16 %v496, %v495
    %v628 = vpack.c.b16 %v498, %v497
    %v629 = vpack.c.b16 %v500, %v499
    %v630 = vpack.c.b16 %v502, %v501
    %v631 = vpack.c.b16 %v504, %v503
    %v632 = vpack.c.b16 %v506, %v505
    %v633 = vpack.c.b16 %v508, %v507
    %v634 = vpack.c.b16 %v510, %v509
    %v635 = vpack.c.b16 %v512, %v511
    %v636 = vpack.c.b16 %v514, %v513
    %v637 = vpack.c.b16 %v516, %v515
    %v638 = vpack.c.b16 %v518, %v517
    %v639 = vpack.c.b16 %v520, %v519
    %v640 = vpack.c.b16 %v522, %v521
    %v641 = vpack.c.b16 %v524, %v523
    %v642 = vpack.c.b16 %v526, %v525
    %v643 = vpack.c.b16 %v528, %v527
    %v644 = vpack.c.b16 %v530, %v529
    %v645 = vpack.c.b16 %v532, %v531
    %v646 = vpack.c.b16 %v534, %v533
    %v647 = vpack.c.b16 %v536, %v535
    %v648 = vpack.c.b16 %v538, %v537
    %v649 = vpack.c.b16 %v540, %v539
    %v650 = vpack.c.b16 %v542, %v541
    %v651 = vpack.c.b16 %v544, %v543
    %v652 = vpack.c.b16 %v546, %v545
    %v653 = vpack.c.b16 %v548, %v547
    %v654 = vpack.c.b16 %v550, %v549
    %v655 = vpack.c.b16 %v552, %v551
    %v656 = vpack.c.b16 %v554, %v553
    %v657 = vpack.c.b16 %v556, %v555
    %v658 = vpack.c.b16 %v558, %v557
    %v659 = vpack.c.b16 %v560, %v559
    %v660 = vpack.c.b16 %v562, %v561
    %v661 = vpack.c.b16 %v564, %v563
    %v662 = vpack.c.b16 %v566, %v565
    %v663 = vpack.c.b16 %v568, %v567
    %v664 = vpack.c.b16 %v570, %v569
    %v665 = vpack.c.b16 %v572, %v571
    %v666 = vpack.c.b16 %v574, %v573
    %v667 = vpack.c.b16 %v576, %v575
    %v668 = vpack.c.b16 %v578, %v577
    %v669 = vpack.c.b16 %v580, %v579
    %v670 = vpack.c.b16 %v582, %v581
    %v671 = vpack.c.b16 %v584, %v583
    %v672 = vpack.c.b16 %v586, %v585
    %v673 = vpack.c.b16 %v588, %v587
    %v674 = vpack.c.b16 %v590, %v589
    %v675 = vpack.c.b16 %v592, %v591
    %v676 = vpack.c.b16 %v594, %v593
    %v677 = vpack.c.b16 %v596, %v595
    %vm759 = vcmask 130048
    %v761 = vsel %vm759, %v110, 0
    %763 = vmatprep.subr.bf16.mxu0 0
    %764 = vmatpush1.bf16.msra.mxu0 %v597
    %765 = vmatprep.subr.bf16.mxu0 0
    %766 = vmatpush1.bf16.msra.mxu0 %v598
    %767 = vmatprep.subr.bf16.mxu0 0
    %768 = vmatpush1.bf16.msra.mxu0 %v599
    %769 = vmatprep.subr.bf16.mxu0 0
    %770 = vmatpush1.bf16.msra.mxu0 %v600
    %771 = vmatprep.subr.bf16.mxu0 0
    %772 = vmatpush1.bf16.msra.mxu0 %v601
    %773 = vmatprep.subr.bf16.mxu0 0
    %774 = vmatpush1.bf16.msra.mxu0 %v602
    %775 = vmatprep.subr.bf16.mxu0 0
    %776 = vmatpush1.bf16.msra.mxu0 %v603
    %777 = vmatprep.subr.bf16.mxu0 0
    %778 = vmatpush1.bf16.msra.mxu0 %v604
    %779 = vmatprep.subr.bf16.mxu0 0
    %780 = vmatpush1.bf16.msra.mxu0 %v605
    %781 = vmatprep.subr.bf16.mxu0 0
    %782 = vmatpush1.bf16.msra.mxu0 %v606
    %783 = vmatprep.subr.bf16.mxu0 0
    %784 = vmatpush1.bf16.msra.mxu0 %v607
    %785 = vmatprep.subr.bf16.mxu0 0
    %786 = vmatpush1.bf16.msra.mxu0 %v608
    %787 = vmatprep.subr.bf16.mxu0 0
    %788 = vmatpush1.bf16.msra.mxu0 %v609
    %789 = vmatprep.subr.bf16.mxu0 0
    %790 = vmatpush1.bf16.msra.mxu0 %v610
    %791 = vmatprep.subr.bf16.mxu0 0
    %792 = vmatpush1.bf16.msra.mxu0 %v611
    %793 = vmatprep.subr.bf16.mxu0 0
    %794 = vmatpush1.bf16.msra.mxu0 %v612
    %795 = vmatprep.mubr.bf16.mxu0 %v101
    %796 = vmatmul.mubr.bf16.gmra.mrb[0].mxu0 %v100
    %v797 = vpop.f32.mrb[0].mxu0
    %v798 = vadd.f32 0.0, %v797
    %v799 = vpop.f32.mrb[0].mxu0
    %v800 = vpop.f32.mrb[0].mxu0
    %v801 = vpop.f32.mrb[0].mxu0
    %802 = vdwg.mxu0
    %803 = vmatprep.subr.bf16.mxu0 0
    %804 = vmatpush1.bf16.msra.mxu0 %v613
    %805 = vmatprep.subr.bf16.mxu0 0
    %806 = vmatpush1.bf16.msra.mxu0 %v614
    %807 = vmatprep.subr.bf16.mxu0 0
    %808 = vmatpush1.bf16.msra.mxu0 %v615
    %809 = vmatprep.subr.bf16.mxu0 0
    %810 = vmatpush1.bf16.msra.mxu0 %v616
    %811 = vmatprep.subr.bf16.mxu0 0
    %812 = vmatpush1.bf16.msra.mxu0 %v617
    %813 = vmatprep.subr.bf16.mxu0 0
    %814 = vmatpush1.bf16.msra.mxu0 %v618
    %815 = vmatprep.subr.bf16.mxu0 0
    %816 = vmatpush1.bf16.msra.mxu0 %v619
    %817 = vmatprep.subr.bf16.mxu0 0
    %818 = vmatpush1.bf16.msra.mxu0 %v620
    %819 = vmatprep.subr.bf16.mxu0 0
    %820 = vmatpush1.bf16.msra.mxu0 %v621
    %821 = vmatprep.subr.bf16.mxu0 0
    %822 = vmatpush1.bf16.msra.mxu0 %v622
    %823 = vmatprep.subr.bf16.mxu0 0
    %824 = vmatpush1.bf16.msra.mxu0 %v623
    %825 = vmatprep.subr.bf16.mxu0 0
    %826 = vmatpush1.bf16.msra.mxu0 %v624
    %827 = vmatprep.subr.bf16.mxu0 0
    %828 = vmatpush1.bf16.msra.mxu0 %v625
    %829 = vmatprep.subr.bf16.mxu0 0
    %830 = vmatpush1.bf16.msra.mxu0 %v626
    %831 = vmatprep.subr.bf16.mxu0 0
    %832 = vmatpush1.bf16.msra.mxu0 %v627
    %833 = vmatprep.subr.bf16.mxu0 0
    %834 = vmatpush1.bf16.msra.mxu0 %v628
    %835 = vmatprep.mubr.bf16.mxu0 %v103
    %836 = vmatmul.mubr.bf16.gmra.mrb[0].mxu0 %v102
    %v837 = vpop.f32.mrb[0].mxu0
    %v838 = vadd.f32 %v798, %v837
    %v839 = vpop.f32.mrb[0].mxu0
    %v840 = vpop.f32.mrb[0].mxu0
    %v841 = vpop.f32.mrb[0].mxu0
    %842 = vdwg.mxu0
    %843 = vmatprep.subr.bf16.mxu0 0
    %844 = vmatpush1.bf16.msra.mxu0 %v629
    %845 = vmatprep.subr.bf16.mxu0 0
    %846 = vmatpush1.bf16.msra.mxu0 %v630
    %847 = vmatprep.subr.bf16.mxu0 0
    %848 = vmatpush1.bf16.msra.mxu0 %v631
    %849 = vmatprep.subr.bf16.mxu0 0
    %850 = vmatpush1.bf16.msra.mxu0 %v632
    %851 = vmatprep.subr.bf16.mxu0 0
    %852 = vmatpush1.bf16.msra.mxu0 %v633
    %853 = vmatprep.subr.bf16.mxu0 0
    %854 = vmatpush1.bf16.msra.mxu0 %v634
    %855 = vmatprep.subr.bf16.mxu0 0
    %856 = vmatpush1.bf16.msra.mxu0 %v635
    %857 = vmatprep.subr.bf16.mxu0 0
    %858 = vmatpush1.bf16.msra.mxu0 %v636
    %859 = vmatprep.subr.bf16.mxu0 0
    %860 = vmatpush1.bf16.msra.mxu0 %v637
    %861 = vmatprep.subr.bf16.mxu0 0
    %862 = vmatpush1.bf16.msra.mxu0 %v638
    %863 = vmatprep.subr.bf16.mxu0 0
    %864 = vmatpush1.bf16.msra.mxu0 %v639
    %865 = vmatprep.subr.bf16.mxu0 0
    %866 = vmatpush1.bf16.msra.mxu0 %v640
    %867 = vmatprep.subr.bf16.mxu0 0
    %868 = vmatpush1.bf16.msra.mxu0 %v641
    %869 = vmatprep.subr.bf16.mxu0 0
    %870 = vmatpush1.bf16.msra.mxu0 %v642
    %871 = vmatprep.subr.bf16.mxu0 0
    %872 = vmatpush1.bf16.msra.mxu0 %v643
    %873 = vmatprep.subr.bf16.mxu0 0
    %874 = vmatpush1.bf16.msra.mxu0 %v644
    %875 = vmatprep.mubr.bf16.mxu0 %v105
    %876 = vmatmul.mubr.bf16.gmra.mrb[0].mxu0 %v104
    %v877 = vpop.f32.mrb[0].mxu0
    %v878 = vadd.f32 %v838, %v877
    %v879 = vpop.f32.mrb[0].mxu0
    %v880 = vpop.f32.mrb[0].mxu0
    %v881 = vpop.f32.mrb[0].mxu0
    %882 = vdwg.mxu0
    %883 = vmatprep.subr.bf16.mxu0 0
    %884 = vmatpush1.bf16.msra.mxu0 %v645
    %885 = vmatprep.subr.bf16.mxu0 0
    %886 = vmatpush1.bf16.msra.mxu0 %v646
    %887 = vmatprep.subr.bf16.mxu0 0
    %888 = vmatpush1.bf16.msra.mxu0 %v647
    %889 = vmatprep.subr.bf16.mxu0 0
    %890 = vmatpush1.bf16.msra.mxu0 %v648
    %891 = vmatprep.subr.bf16.mxu0 0
    %892 = vmatpush1.bf16.msra.mxu0 %v649
    %893 = vmatprep.subr.bf16.mxu0 0
    %894 = vmatpush1.bf16.msra.mxu0 %v650
    %895 = vmatprep.subr.bf16.mxu0 0
    %896 = vmatpush1.bf16.msra.mxu0 %v651
    %897 = vmatprep.subr.bf16.mxu0 0
    %898 = vmatpush1.bf16.msra.mxu0 %v652
    %899 = vmatprep.subr.bf16.mxu0 0
    %900 = vmatpush1.bf16.msra.mxu0 %v653
    %901 = vmatprep.subr.bf16.mxu0 0
    %902 = vmatpush1.bf16.msra.mxu0 %v654
    %903 = vmatprep.subr.bf16.mxu0 0
    %904 = vmatpush1.bf16.msra.mxu0 %v655
    %905 = vmatprep.subr.bf16.mxu0 0
    %906 = vmatpush1.bf16.msra.mxu0 %v656
    %907 = vmatprep.subr.bf16.mxu0 0
    %908 = vmatpush1.bf16.msra.mxu0 %v657
    %909 = vmatprep.subr.bf16.mxu0 0
    %910 = vmatpush1.bf16.msra.mxu0 %v658
    %911 = vmatprep.subr.bf16.mxu0 0
    %912 = vmatpush1.bf16.msra.mxu0 %v659
    %913 = vmatprep.subr.bf16.mxu0 0
    %914 = vmatpush1.bf16.msra.mxu0 %v660
    %915 = vmatprep.mubr.bf16.mxu0 %v107
    %916 = vmatmul.mubr.bf16.gmra.mrb[0].mxu0 %v106
    %v917 = vpop.f32.mrb[0].mxu0
    %v918 = vadd.f32 %v878, %v917
    %v919 = vpop.f32.mrb[0].mxu0
    %v920 = vpop.f32.mrb[0].mxu0
    %v921 = vpop.f32.mrb[0].mxu0
    %922 = vdwg.mxu0
    %923 = vmatprep.subr.bf16.mxu0 0
    %924 = vmatpush1.bf16.msra.mxu0 %v661
    %925 = vmatprep.subr.bf16.mxu0 0
    %926 = vmatpush1.bf16.msra.mxu0 %v662
    %927 = vmatprep.subr.bf16.mxu0 0
    %928 = vmatpush1.bf16.msra.mxu0 %v663
    %929 = vmatprep.subr.bf16.mxu0 0
    %930 = vmatpush1.bf16.msra.mxu0 %v664
    %931 = vmatprep.subr.bf16.mxu0 0
    %932 = vmatpush1.bf16.msra.mxu0 %v665
    %933 = vmatprep.subr.bf16.mxu0 0
    %934 = vmatpush1.bf16.msra.mxu0 %v666
    %935 = vmatprep.subr.bf16.mxu0 0
    %936 = vmatpush1.bf16.msra.mxu0 %v667
    %937 = vmatprep.subr.bf16.mxu0 0
    %938 = vmatpush1.bf16.msra.mxu0 %v668
    %939 = vmatprep.subr.bf16.mxu0 0
    %940 = vmatpush1.bf16.msra.mxu0 %v669
    %941 = vmatprep.subr.bf16.mxu0 0
    %942 = vmatpush1.bf16.msra.mxu0 %v670
    %943 = vmatprep.subr.bf16.mxu0 0
    %944 = vmatpush1.bf16.msra.mxu0 %v671
    %945 = vmatprep.subr.bf16.mxu0 0
    %946 = vmatpush1.bf16.msra.mxu0 %v672
    %947 = vmatprep.subr.bf16.mxu0 0
    %948 = vmatpush1.bf16.msra.mxu0 %v673
    %949 = vmatprep.subr.bf16.mxu0 0
    %950 = vmatpush1.bf16.msra.mxu0 %v674
    %951 = vmatprep.subr.bf16.mxu0 0
    %952 = vmatpush1.bf16.msra.mxu0 %v675
    %953 = vmatprep.subr.bf16.mxu0 0
    %954 = vmatpush1.bf16.msra.mxu0 %v676
    %955 = vmatprep.mubr.bf16.mxu0 %v109
    %956 = vmatmul.mubr.bf16.gmra.mrb[0].mxu0 %v108
    %v957 = vpop.f32.mrb[0].mxu0
    %v958 = vadd.f32 %v918, %v957
    %v959 = vpop.f32.mrb[0].mxu0
    %v960 = vpop.f32.mrb[0].mxu0
    %v961 = vpop.f32.mrb[0].mxu0
    %962 = vdwg.mxu0
    %963 = vmatprep.subr.bf16.mxu0 0
    %964 = vmatpush1.bf16.msra.mxu0 %v677
    %965 = vmatprep.subr.bf16.mxu0 0
    %966 = vmatpush1.bf16.msra.mxu0 0
    %967 = vmatprep.subr.bf16.mxu0 0
    %968 = vmatpush1.bf16.msra.mxu0 0
    %969 = vmatprep.subr.bf16.mxu0 0
    %970 = vmatpush1.bf16.msra.mxu0 0
    %971 = vmatprep.subr.bf16.mxu0 0
    %972 = vmatpush1.bf16.msra.mxu0 0
    %973 = vmatprep.subr.bf16.mxu0 0
    %974 = vmatpush1.bf16.msra.mxu0 0
    %975 = vmatprep.subr.bf16.mxu0 0
    %976 = vmatpush1.bf16.msra.mxu0 0
    %977 = vmatprep.subr.bf16.mxu0 0
    %978 = vmatpush1.bf16.msra.mxu0 0
    %979 = vmatprep.subr.bf16.mxu0 0
    %980 = vmatpush1.bf16.msra.mxu0 0
    %981 = vmatprep.subr.bf16.mxu0 0
    %982 = vmatpush1.bf16.msra.mxu0 0
    %983 = vmatprep.subr.bf16.mxu0 0
    %984 = vmatpush1.bf16.msra.mxu0 0
    %985 = vmatprep.subr.bf16.mxu0 0
    %986 = vmatpush1.bf16.msra.mxu0 0
    %987 = vmatprep.subr.bf16.mxu0 0
    %988 = vmatpush1.bf16.msra.mxu0 0
    %989 = vmatprep.subr.bf16.mxu0 0
    %990 = vmatpush1.bf16.msra.mxu0 0
    %991 = vmatprep.subr.bf16.mxu0 0
    %992 = vmatpush1.bf16.msra.mxu0 0
    %993 = vmatprep.subr.bf16.mxu0 0
    %994 = vmatpush1.bf16.msra.mxu0 0
    %995 = vmatprep.mubr.bf16.mxu0 0
    %996 = vmatmul.mubr.bf16.gmra.mrb[0].mxu0 %v761
    %v997 = vpop.f32.mrb[0].mxu0
    %v998 = vadd.f32 %v958, %v997
    %v999 = vpop.f32.mrb[0].mxu0
    %v1000 = vpop.f32.mrb[0].mxu0
    %v1001 = vpop.f32.mrb[0].mxu0
    %1002 = vdwg.mxu0
    %v1003 = vpack.c.bf16 %v998, %v998
    %v1004 = vld [vmem:[%s2] sm:$0xf]
    %v1005 = vld [vmem:[%s2 + $0x4] sm:$0xf]
    %v1006 = vld [vmem:[%s2 + $0x8] sm:$0xf]
    %v1007 = vld [vmem:[%s2 + $0xc] sm:$0xf]
    %v1008 = vld [vmem:[%s2 + $0x10] sm:$0xf]
    %v1009 = vld [vmem:[%s2 + $0x14] sm:$0xf]
    %v1010 = vld [vmem:[%s2 + $0x18] sm:$0xf]
    %v1011 = vld [vmem:[%s2 + $0x1c] sm:$0xf]
    %v1012 = vld [vmem:[%s2 + $0x20] sm:$0xf]
    %v1013 = vld [vmem:[%s2 + $0x24] sm:$0xf]
    %v1014 = vld [vmem:[%s2 + $0x28] sm:$0xf]
    %v1015 = vld [vmem:[%s2 + $0x2c] sm:$0xf]
    %v1016 = vld [vmem:[%s2 + $0x30] sm:$0xf]
    %v1017 = vld [vmem:[%s2 + $0x34] sm:$0xf]
    %v1018 = vld [vmem:[%s2 + $0x38] sm:$0xf]
    %v1019 = vld [vmem:[%s2 + $0x3c] sm:$0xf]
    %v1020 = vld [vmem:[%s3] sm:$0x1]
    %v1022 = vlaneseq
    %v1023 = vshrl.u32 %v1022, 7
    %v1024 = vsub.s32 0, %v1023
    %v1025 = vrot.slane %v1020, %v1024
    %v1043 = vunpack.c.l.b16 %v1004
    %v1044 = vunpack.c.l.b16 %v1005
    %v1045 = vunpack.c.l.b16 %v1006
    %v1046 = vunpack.c.l.b16 %v1007
    %v1047 = vunpack.c.l.b16 %v1008
    %v1048 = vunpack.c.l.b16 %v1009
    %v1049 = vunpack.c.l.b16 %v1010
    %v1050 = vunpack.c.l.b16 %v1011
    %v1051 = vunpack.c.l.b16 %v1012
    %v1052 = vunpack.c.l.b16 %v1013
    %v1053 = vunpack.c.l.b16 %v1014
    %v1054 = vunpack.c.l.b16 %v1015
    %v1055 = vunpack.c.l.b16 %v1016
    %v1056 = vunpack.c.l.b16 %v1017
    %v1057 = vunpack.c.l.b16 %v1018
    %v1058 = vunpack.c.l.b16 %v1019
    %v1059 = vpack.c.b16 %v1044, %v1043
    %v1060 = vpack.c.b16 %v1046, %v1045
    %v1061 = vpack.c.b16 %v1048, %v1047
    %v1062 = vpack.c.b16 %v1050, %v1049
    %v1063 = vpack.c.b16 %v1052, %v1051
    %v1064 = vpack.c.b16 %v1054, %v1053
    %v1065 = vpack.c.b16 %v1056, %v1055
    %v1066 = vpack.c.b16 %v1058, %v1057
    %1075 = vmatprep.subr.bf16.mxu0 0
    %1076 = vmatpush1.bf16.msra.mxu0 %v1059
    %1077 = vmatprep.subr.bf16.mxu0 0
    %1078 = vmatpush1.bf16.msra.mxu0 %v1060
    %1079 = vmatprep.subr.bf16.mxu0 0
    %1080 = vmatpush1.bf16.msra.mxu0 %v1061
    %1081 = vmatprep.subr.bf16.mxu0 0
    %1082 = vmatpush1.bf16.msra.mxu0 %v1062
    %1083 = vmatprep.subr.bf16.mxu0 0
    %1084 = vmatpush1.bf16.msra.mxu0 %v1063
    %1085 = vmatprep.subr.bf16.mxu0 0
    %1086 = vmatpush1.bf16.msra.mxu0 %v1064
    %1087 = vmatprep.subr.bf16.mxu0 0
    %1088 = vmatpush1.bf16.msra.mxu0 %v1065
    %1089 = vmatprep.subr.bf16.mxu0 0
    %1090 = vmatpush1.bf16.msra.mxu0 %v1066
    %1091 = vmatprep.subr.bf16.mxu0 0
    %1092 = vmatpush1.bf16.msra.mxu0 0
    %1093 = vmatprep.subr.bf16.mxu0 0
    %1094 = vmatpush1.bf16.msra.mxu0 0
    %1095 = vmatprep.subr.bf16.mxu0 0
    %1096 = vmatpush1.bf16.msra.mxu0 0
    %1097 = vmatprep.subr.bf16.mxu0 0
    %1098 = vmatpush1.bf16.msra.mxu0 0
    %1099 = vmatprep.subr.bf16.mxu0 0
    %1100 = vmatpush1.bf16.msra.mxu0 0
    %1101 = vmatprep.subr.bf16.mxu0 0
    %1102 = vmatpush1.bf16.msra.mxu0 0
    %1103 = vmatprep.subr.bf16.mxu0 0
    %1104 = vmatpush1.bf16.msra.mxu0 0
    %1105 = vmatprep.subr.bf16.mxu0 0
    %1106 = vmatpush1.bf16.msra.mxu0 0
    %1107 = vmatprep.mubr.bf16.mxu0 0
    %1108 = vmatmul.mubr.bf16.gmra.mrb[0].mxu0 %v1003
    %v1109 = vpop.f32.mrb[0].mxu0
    %v1110 = vadd.f32 %v1025, %v1109
    %v1111 = vpop.f32.mrb[0].mxu0
    %v1112 = vpop.f32.mrb[0].mxu0
    %v1113 = vpop.f32.mrb[0].mxu0
    %1114 = vdwg.mxu0
    %1115 = vst [vmem:[#allocation5] sm:$0x3] %v1110
    // Predicated region
    $region22: #{hydraplus_forward.1} parent=1 // pred_check
      _
    $region23: #{hydraplus_forward.1} parent=1 // pred_check_branch
      %1117 = sbr.rel (0) target = $region25
    $region24: #{hydraplus_forward.1} parent=1 // pred_region
      %s1119 = ssub.s32 32, 32
      %1120 = vsyncadd [#allocation4], %s1119
      %s1122 = sshll.u32 [#allocation5], 4
      %s1123 = int_to_ptr.vmem [resolvable:$true] %s1122
      %1125 = dma.vmem_to_hbm [thread:$0]  %s1123, 32, %s4, [#allocation4]
    $region25: #{hydraplus_forward.1} parent=1 // pred_fallthru
      _
    // Predicated region
    $region26: #{hydraplus_forward.1} parent=1 // pred_check
      _
    $region27: #{hydraplus_forward.1} parent=1 // pred_check_branch
      %1127 = sbr.rel (0) target = $region29
    $region28: #{hydraplus_forward.1} parent=1 // pred_region
      %1128 = dma.done [#allocation4], 32
    $region29: #{hydraplus_forward.1} parent=1 // pred_fallthru
      _
    %1129 = vsyncpa [#allocation3], 1
    %1130 = vsyncpa [#allocation4], 1

</llo_original>
